<compile_context>
chip_gen: v7x
topology: tpu7x:2x2x1
jax: 0.10.0
libtpu: 0.0.40
codegen_flags: <defaults>
</compile_context>

<pallas_src>
import functools

import jax
import jax.numpy as jnp
from jax.experimental import pallas as pl
from jax.experimental.pallas import tpu as pltpu

LANE = 128


# ---------------------------------------------------------------------------
# small helpers (trace-time Python only)
# ---------------------------------------------------------------------------
def _round_up(x, m):
    return ((x + m - 1) // m) * m


def _divisors(n):
    out = set()
    i = 1
    while i * i <= n:
        if n % i == 0:
            out.add(i)
            out.add(n // i)
        i += 1
    return sorted(out)


def _largest_divisor_leq(n, cap, multiple_of=1):
    best = None
    for d in _divisors(n):
        if d <= cap and d % multiple_of == 0:
            best = d
    return best


def _vmem_budget():
    """(working-set budget bytes, vmem_limit bytes) per device generation."""
    kind = ""
    try:
        kind = jax.devices()[0].device_kind.lower()
    except Exception:
        pass
    if "v5 lite" in kind or "v5e" in kind or "v5lite" in kind:
        # v5e: 16 MiB scoped-VMEM default; HBM slow enough that ~5 MiB per
        # DMA'd block already hides the per-step overhead.
        return 10 << 20, 16 << 20
    # v6e / v7x / unknown: stay inside the 32 MiB scoped default and well
    # under v7x's 64 MiB physical VMEM while using ~12 MiB of DMA per step.
    return 26 << 20, 32 << 20


# ---------------------------------------------------------------------------
# fused path: reduction + x->out copy in one pass
# ---------------------------------------------------------------------------
def _fused_reduce_copy_kernel(x_ref, sum_ref, copy_ref, acc_ref, *, inv_gm1):
    """Grid (npar, t1).  x_ref/copy_ref: (g, bpg, tc).  sum_ref: (1, 8, 128).

    Reads one column tile of the grouped view, forwards it verbatim into the
    x-portion of the output (so x is read from HBM exactly once) and
    accumulates per-column std into a VMEM accumulator.  Each core writes its
    raw partial std-sum on its last sequential step.
    """
    k = pl.program_id(1)

    @pl.when(k == 0)
    def _():
        acc_ref[...] = jnp.zeros_like(acc_ref)

    xb = x_ref[...]                                       # (g, bpg, tc)
    copy_ref[...] = xb                                    # fused x -> out copy
    xf = xb.astype(jnp.float32)
    mean = jnp.mean(xf, axis=0)                           # (bpg, tc)
    d = xf - mean[None]
    var = jnp.sum(d * d, axis=0) * jnp.float32(inv_gm1)   # unbiased (ddof=1)
    acc_ref[...] += jnp.sqrt(var + jnp.float32(1e-8))

    @pl.when(k == pl.num_programs(1) - 1)
    def _():
        total = jnp.sum(acc_ref[...])
        sum_ref[...] = jnp.broadcast_to(total, sum_ref.shape).astype(jnp.float32)


def _std_fill_kernel(std_ref, out_in_ref, out_ref, fill_ref, sem_ref, *,
                     chw, n_chunks, col_chunk):
    """Fill only the std channel out[:, :, chw:] in-place via DMA.

    std_ref: (1, 1) f32 in SMEM.  out_in_ref/out_ref: (g, bpg, ochw) in HBM,
    aliased via input_output_aliases.  fill_ref: (g, bpg, col_chunk) VMEM.
    """
    del out_in_ref                                        # aliased with out_ref
    fill_ref[...] = jnp.broadcast_to(
        std_ref[0, 0].astype(fill_ref.dtype), fill_ref.shape)

    @pl.loop(0, n_chunks)
    def _(j):
        cp = pltpu.make_async_copy(
            fill_ref,
            out_ref.at[:, :, pl.ds(chw + j * col_chunk, col_chunk)],
            sem_ref)
        cp.start()
        cp.wait()


# ---------------------------------------------------------------------------
# fallback path: dense (g, s, 128) reduction + separate lane-dense concat
# ---------------------------------------------------------------------------
def _std_reduce_kernel(xg_ref, out_ref, acc_ref, *, n_valid, inv_gm1, needs_mask):
    """Mean-of-std reduction over the (g, s, 128) grouped view."""
    step = pl.program_id(0)

    @pl.when(step == 0)
    def _():
        acc_ref[...] = jnp.zeros_like(acc_ref)

    xb = xg_ref[...].astype(jnp.float32)                  # (g, ts, 128)
    mean = jnp.mean(xb, axis=0)                           # (ts, 128)
    d = xb - mean[None]
    var = jnp.sum(d * d, axis=0) * jnp.float32(inv_gm1)
    std = jnp.sqrt(var + jnp.float32(1e-8))               # (ts, 128)

    acc_rows = acc_ref.shape[0]

    def _accumulate(v):
        acc_ref[...] += jnp.sum(v.reshape(-1, acc_rows, LANE), axis=0)

    if needs_mask:
        last = pl.num_programs(0) - 1

        @pl.when(step < last)
        def _():
            _accumulate(std)

        @pl.when(step == last)
        def _():
            ts = std.shape[0]
            base = step * (ts * LANE)
            sub = jax.lax.broadcasted_iota(jnp.int32, (ts, LANE), 0)
            lane = jax.lax.broadcasted_iota(jnp.int32, (ts, LANE), 1)
            col = base + sub * LANE + lane
            _accumulate(jnp.where(col < n_valid, std, jnp.float32(0.0)))
    else:
        _accumulate(std)

    @pl.when(step == pl.num_programs(0) - 1)
    def _():
        total = jnp.sum(acc_ref[...])
        out_ref[...] = (total / jnp.float32(n_valid)).reshape(1, 1)


def _concat_kernel(std_ref, x_ref, out_ref, *, chw):
    """out[:, :chw] = x, out[:, chw:] = std scalar (lane-dense batch rows)."""
    tb = out_ref.shape[0]
    pad = out_ref.shape[1] - chw
    out_ref[:, :chw] = x_ref[...].astype(out_ref.dtype)
    out_ref[:, chw:] = jnp.full((tb, pad), std_ref[0, 0], dtype=out_ref.dtype)


# ---------------------------------------------------------------------------
# wrapper
# ---------------------------------------------------------------------------
@functools.partial(jax.jit, static_argnames=("group_size", "max_tile_cols"))
def minibatch_stddev(x, group_size: int = 4, *, max_tile_cols=None):
    b, c, h, w = x.shape
    g = int(group_size)
    assert g >= 2, "group_size must be >= 2 (torch.var with ddof=1 needs >1 sample)"
    assert b % g == 0
    bpg = b // g
    hw = h * w
    chw = c * hw
    ochw = chw + hw
    n = bpg * chw

    dtype = x.dtype
    itemsize = jnp.dtype(dtype).itemsize
    sub_align = max(8, (8 * 4) // itemsize)               # sublane granule
    inv_gm1 = 1.0 / float(g - 1)

    ws_budget, vmem_limit = _vmem_budget()

    # ---------------- fused path --------------------------------------------
    # Needs a 128-divisible per-sample row and a batch-per-group that is not so
    # small that sublane padding makes the VPU co-limiting.
    fused = (chw % LANE == 0) and (2 * bpg >= sub_align)
    tc = None
    if fused:
        pad_in = _round_up(bpg, sub_align)
        pad_f32 = _round_up(bpg, 8)
        # 2x double-buffered input + 2x double-buffered copy-output + f32 acc.
        per_col = 4 * g * pad_in * itemsize + pad_f32 * 4
        tc_cap = ws_budget // per_col
        if max_tile_cols is not None:
            tc_cap = min(tc_cap, max_tile_cols)
        tc = _largest_divisor_leq(chw, tc_cap, multiple_of=LANE)
        fused = tc is not None

    if fused:
        n_tiles = chw // tc
        # Split the sequential reduction across both v7x TensorCores when the
        # tile count allows it (harmless serialization on 1-core chips).
        npar = 2 if (n_tiles % 2 == 0 and n_tiles >= 2) else 1
        t1 = n_tiles // npar

        x3 = jnp.reshape(x, (g, bpg, chw))
        sums, out3 = pl.pallas_call(
            functools.partial(_fused_reduce_copy_kernel, inv_gm1=inv_gm1),
            out_shape=(jax.ShapeDtypeStruct((npar, 8, LANE), jnp.float32),
                       jax.ShapeDtypeStruct((g, bpg, ochw), dtype)),
            grid_spec=pltpu.PrefetchScalarGridSpec(
                num_scalar_prefetch=0,
                grid=(npar, t1),
                in_specs=[
                    pl.BlockSpec((g, bpg, tc), lambda p, k: (0, 0, p * t1 + k)),
                ],
                out_specs=[
                    pl.BlockSpec((1, 8, LANE), lambda p, k: (p, 0, 0)),
                    pl.BlockSpec((g, bpg, tc), lambda p, k: (0, 0, p * t1 + k)),
                ],
                scratch_shapes=[pltpu.VMEM((bpg, tc), jnp.float32)],
            ),
            compiler_params=pltpu.CompilerParams(
                dimension_semantics=("parallel", "arbitrary"),
                vmem_limit_bytes=vmem_limit),
        )(x3)

        std_scalar = (jnp.sum(sums[:, 0, 0]) / jnp.float32(n)).reshape(1, 1)

        # Tiny follow-up: fill only the std channel (b*h*w elements) in-place.
        col_chunk = 1
        for d in reversed(_divisors(hw)):
            if g * _round_up(bpg, 8) * _round_up(d, LANE) * itemsize <= (4 << 20):
                col_chunk = d
                break
        n_chunks = hw // col_chunk

        out3 = pl.pallas_call(
            functools.partial(_std_fill_kernel, chw=chw,
                              n_chunks=n_chunks, col_chunk=col_chunk),
            out_shape=jax.ShapeDtypeStruct((g, bpg, ochw), dtype),
            in_specs=[
                pl.BlockSpec(memory_space=pltpu.MemorySpace.SMEM),   # std scalar
                pl.BlockSpec(memory_space=pl.ANY),                   # partial out
            ],
            out_specs=pl.BlockSpec(memory_space=pl.ANY),
            scratch_shapes=[pltpu.VMEM((g, bpg, col_chunk), dtype),
                            pltpu.SemaphoreType.DMA(())],
            input_output_aliases={1: 0},
            compiler_params=pltpu.CompilerParams(has_side_effects=True),
        )(std_scalar, out3)

        return jnp.reshape(out3, (b, c + 1, h, w))

    # ---------------- fallback path ------------------------------------------
    # Dense (g, s, 128) reduction (lane/sublane dense for any batch-per-group),
    # then a separate lane-dense concat pass.
    n128 = _round_up(n, LANE)
    s = n128 // LANE
    xg = jnp.reshape(x, (g, n))
    if n128 != n:
        # TODO(synk): this materializes a padded copy of x in HBM; only hit
        # when c*h*w*(b/g) is not 128-divisible.
        xg = jnp.pad(xg, ((0, 0), (0, n128 - n)))
    xg = jnp.reshape(xg, (g, s, LANE))

    ts_cap = max(sub_align, ws_budget // (2 * g * LANE * itemsize))
    if s <= sub_align:
        ts = s
    else:
        ts = min((ts_cap // sub_align) * sub_align, (s // sub_align) * sub_align)
        ts = max(ts, sub_align)
    num_steps = pl.cdiv(s, ts)
    needs_mask = (num_steps * ts * LANE != n)
    acc_rows = 8 if ts % 8 == 0 else ts

    std_scalar = pl.pallas_call(
        functools.partial(_std_reduce_kernel, n_valid=n, inv_gm1=inv_gm1,
                          needs_mask=needs_mask),
        out_shape=jax.ShapeDtypeStruct((1, 1), jnp.float32),
        grid_spec=pltpu.PrefetchScalarGridSpec(
            num_scalar_prefetch=0,
            grid=(num_steps,),
            in_specs=[pl.BlockSpec((g, ts, LANE), lambda i: (0, i, 0))],
            out_specs=pl.BlockSpec((1, 1), lambda i: (0, 0)),
            scratch_shapes=[pltpu.VMEM((acc_rows, LANE), jnp.float32)],
        ),
        compiler_params=pltpu.CompilerParams(
            dimension_semantics=("arbitrary",),
            vmem_limit_bytes=vmem_limit),
    )(xg)

    # Lane-dense concat: x copied row-wise, std channel appended per row.
    row_bytes = 2 * (chw + ochw) * itemsize               # double-buffered in+out
    cands = [d for d in _divisors(b) if d % sub_align == 0 or d == b]
    fitting = [d for d in cands if d * row_bytes <= ws_budget]
    tb = max(fitting) if fitting else min(cands)
    concat_vmem = max(vmem_limit, tb * row_bytes + (4 << 20))

    x2 = jnp.reshape(x, (b, chw))
    out2 = pl.pallas_call(
        functools.partial(_concat_kernel, chw=chw),
        out_shape=jax.ShapeDtypeStruct((b, ochw), dtype),
        grid_spec=pltpu.PrefetchScalarGridSpec(
            num_scalar_prefetch=0,
            grid=(b // tb,),
            in_specs=[
                pl.BlockSpec(memory_space=pltpu.MemorySpace.SMEM),   # std scalar
                pl.BlockSpec((tb, chw), lambda i: (i, 0)),
            ],
            out_specs=pl.BlockSpec((tb, ochw), lambda i: (i, 0)),
        ),
        compiler_params=pltpu.CompilerParams(
            dimension_semantics=("parallel",),
            vmem_limit_bytes=concat_vmem),
    )(std_scalar, x2)

    return jnp.reshape(out2, (b, c + 1, h, w))


# ---------------------------------------------------------------------------
# reference + tests
# ---------------------------------------------------------------------------
def _reference(x, group_size):
    b, _, h, w = x.shape
    xg = jnp.reshape(x, (group_size, -1))
    var = jnp.var(xg, axis=0, ddof=1)
    std_scalar = jnp.mean(jnp.sqrt(var + 1e-8))
    return jnp.concatenate(
        [x, jnp.broadcast_to(std_scalar, (b, 1, h, w)).astype(x.dtype)], axis=1)


if __name__ == "__main__":
    group_size = 4
    key = jax.random.PRNGKey(0)

    # 1) Fused path (bpg=4, chw=1024): single column tile.
    B, C, H, W = 16, 4, 16, 16
    x = jax.random.normal(key, (B, C, H, W), dtype=jnp.float32)
    out = jax.block_until_ready(minibatch_stddev(x, group_size=group_size))
    ref = _reference(x, group_size)
    assert out.shape == (B, C + 1, H, W)
    assert jnp.allclose(out, ref, atol=1e-5, rtol=1e-5), "fused path mismatch"

    # 2) Fused path with several column tiles (exercises the 2-way core split).
    out_t = jax.block_until_ready(
        minibatch_stddev(x, group_size=group_size, max_tile_cols=256))
    assert jnp.allclose(out_t, ref, atol=1e-5, rtol=1e-5), "tiled fused mismatch"

    # 3) Fallback path: small batch-per-group (bpg=2), tiny feature maps.
    x2 = jax.random.normal(jax.random.PRNGKey(1), (8, 2, 8, 8), dtype=jnp.float32)
    out2 = jax.block_until_ready(minibatch_stddev(x2, group_size=group_size))
    ref2 = _reference(x2, group_size)
    assert out2.shape == (8, 3, 8, 8)
    assert jnp.allclose(out2, ref2, atol=1e-5, rtol=1e-5), "fallback mismatch"

    # 4) Fallback with a non-128-divisible flattened size (pad + masked tail).
    x3 = jax.random.normal(jax.random.PRNGKey(2), (8, 3, 5, 5), dtype=jnp.float32)
    out3 = jax.block_until_ready(minibatch_stddev(x3, group_size=group_size))
    ref3 = _reference(x3, group_size)
    assert out3.shape == (8, 4, 5, 5)
    assert jnp.allclose(out3, ref3, atol=1e-5, rtol=1e-5), "masked fallback mismatch"

    print("KERNEL_OK")
</pallas_src>

<mosaic_0001>
module attributes {stable_mosaic.version = 11 : i64} {
  func.func @_std_fill_kernel(%arg0: memref<1x1xf32, #tpu.memory_space<smem>>, %arg1: memref<4x4x1280xf32, #tpu.memory_space<any>>, %arg2: memref<4x4x1280xf32, #tpu.memory_space<any>>, %arg3: memref<4x4x256xf32, #tpu.memory_space<vmem>>, %arg4: memref<!tpu.dma_semaphore, #tpu.memory_space<semaphore_mem>>) attributes {dimension_semantics = [], scalar_prefetch = 0 : i64, scratch_operands = 2 : i64, tpu.core_type = #tpu.core_type<tc>} {
    %c0 = arith.constant 0 : index
    %c0_0 = arith.constant 0 : index
    %0 = memref.load %arg0[%c0, %c0_0] : memref<1x1xf32, #tpu.memory_space<smem>>
    %1 = vector.broadcast %0 : f32 to vector<4x4x256xf32>
    %c0_1 = arith.constant 0 : index
    %c0_2 = arith.constant 0 : index
    %c0_3 = arith.constant 0 : index
    %2 = vector.load %arg3[%c0_1, %c0_2, %c0_3] : memref<4x4x256xf32, #tpu.memory_space<vmem>>, vector<4x4x256xf32>
    tpu.vector_store %arg3[%c0_1, %c0_2, %c0_3], %1 {strides = array<i32>} : memref<4x4x256xf32, #tpu.memory_space<vmem>>, vector<4x4x256xf32>,
    %c0_i32 = arith.constant 0 : i32
    %c1_i32 = arith.constant 1 : i32
    %3 = arith.muli %c0_i32, %c1_i32 : i32
    %c0_i32_4 = arith.constant 0 : i32
    %4 = arith.addi %c0_i32_4, %3 : i32
    %c256_i32 = arith.constant 256 : i32
    %5 = arith.muli %4, %c256_i32 : i32
    %c1024_i32 = arith.constant 1024 : i32
    %6 = arith.addi %c1024_i32, %5 : i32
    %c0_i32_5 = arith.constant 0 : i32
    %c0_i32_6 = arith.constant 0 : i32
    %7 = tpu.memref_slice %arg2[%c0_i32_5, %c0_i32_6, %6] : memref<4x4x1280xf32, #tpu.memory_space<any>> -> memref<4x4x256xf32, #tpu.memory_space<any>>
    tpu.enqueue_dma source(%arg3 : memref<4x4x256xf32, #tpu.memory_space<vmem>>) target(%7 : memref<4x4x256xf32, #tpu.memory_space<any>>) target_semaphore(%arg4 : memref<!tpu.dma_semaphore, #tpu.memory_space<semaphore_mem>>)
    %c0_i32_7 = arith.constant 0 : i32
    %c0_i32_8 = arith.constant 0 : i32
    %8 = tpu.memref_slice %arg2[%c0_i32_7, %c0_i32_8, %6] : memref<4x4x1280xf32, #tpu.memory_space<any>> -> memref<4x4x256xf32, #tpu.memory_space<any>>
    tpu.wait_dma2 semaphore(%arg4 : memref<!tpu.dma_semaphore, #tpu.memory_space<semaphore_mem>>) src(%arg3 : memref<4x4x256xf32, #tpu.memory_space<vmem>>) dst(%8 : memref<4x4x256xf32, #tpu.memory_space<any>>)
    %c1_i32_9 = arith.constant 1 : i32
    return
  }
}

module attributes {stable_mosaic.version = 11 : i64} {
  func.func @_fused_reduce_copy_kernel(%arg0: i32, %arg1: i32, %arg2: memref<4x4x1024xf32, #tpu.memory_space<vmem>>, %arg3: memref<1x8x128xf32, #tpu.memory_space<vmem>>, %arg4: memref<4x4x1024xf32, #tpu.memory_space<vmem>>, %arg5: memref<4x1024xf32, #tpu.memory_space<vmem>>) attributes {dimension_semantics = [#tpu.dimension_semantics<parallel>, #tpu.dimension_semantics<arbitrary>], iteration_bounds = array<i64: 1, 1>, scalar_prefetch = 0 : i64, scratch_operands = 1 : i64, tpu.core_type = #tpu.core_type<tc>, window_params = [{transform_indices = @transform_0, window_bounds = array<i64: 4, 4, 1024>}, {transform_indices = @transform_1, window_bounds = array<i64: 1, 8, 128>}, {transform_indices = @transform_2, window_bounds = array<i64: 4, 4, 1024>}]} {
    %c0_i32 = arith.constant 0 : i32
    %0 = arith.cmpi eq, %arg1, %c0_i32 : i32
    %1 = arith.extui %0 : i1 to i32
    %c0_i32_0 = arith.constant 0 : i32
    %2 = arith.cmpi ne, %1, %c0_i32_0 : i32
    scf.if %2 {
      %cst_16 = arith.constant 0.000000e+00 : f32
      %24 = vector.broadcast %cst_16 : f32 to vector<4x1024xf32>
      %c0_17 = arith.constant 0 : index
      %c0_18 = arith.constant 0 : index
      %25 = vector.load %arg5[%c0_17, %c0_18] : memref<4x1024xf32, #tpu.memory_space<vmem>>, vector<4x1024xf32>
      tpu.vector_store %arg5[%c0_17, %c0_18], %24 {strides = array<i32>} : memref<4x1024xf32, #tpu.memory_space<vmem>>, vector<4x1024xf32>,
    } else {
    }
    %c0 = arith.constant 0 : index
    %c0_1 = arith.constant 0 : index
    %c0_2 = arith.constant 0 : index
    %3 = vector.load %arg2[%c0, %c0_1, %c0_2] : memref<4x4x1024xf32, #tpu.memory_space<vmem>>, vector<4x4x1024xf32>
    %c0_3 = arith.constant 0 : index
    %c0_4 = arith.constant 0 : index
    %c0_5 = arith.constant 0 : index
    %4 = vector.load %arg4[%c0_3, %c0_4, %c0_5] : memref<4x4x1024xf32, #tpu.memory_space<vmem>>, vector<4x4x1024xf32>
    tpu.vector_store %arg4[%c0_3, %c0_4, %c0_5], %3 {strides = array<i32>} : memref<4x4x1024xf32, #tpu.memory_space<vmem>>, vector<4x4x1024xf32>,
    %cst = arith.constant dense<0.000000e+00> : vector<4x1024xf32>
    %5 = vector.multi_reduction <add>, %3, %cst [0] : vector<4x4x1024xf32> to vector<4x1024xf32>
    %cst_6 = arith.constant 4.000000e+00 : f32
    %6 = vector.broadcast %cst_6 : f32 to vector<4x1024xf32>
    %7 = arith.divf %5, %6 : vector<4x1024xf32>
    %8 = vector.shape_cast %7 : vector<4x1024xf32> to vector<1x4x1024xf32>
    %9 = vector.broadcast %8 : vector<1x4x1024xf32> to vector<4x4x1024xf32>
    %10 = arith.subf %3, %9 : vector<4x4x1024xf32>
    %11 = arith.mulf %10, %10 : vector<4x4x1024xf32>
    %cst_7 = arith.constant dense<0.000000e+00> : vector<4x1024xf32>
    %12 = vector.multi_reduction <add>, %11, %cst_7 [0] : vector<4x4x1024xf32> to vector<4x1024xf32>
    %cst_8 = arith.constant 0.333333343 : f32
    %13 = vector.broadcast %cst_8 : f32 to vector<4x1024xf32>
    %14 = arith.mulf %12, %13 : vector<4x1024xf32>
    %c0_9 = arith.constant 0 : index
    %c0_10 = arith.constant 0 : index
    %15 = vector.load %arg5[%c0_9, %c0_10] : memref<4x1024xf32, #tpu.memory_space<vmem>>, vector<4x1024xf32>
    %cst_11 = arith.constant 9.99999993E-9 : f32
    %16 = vector.broadcast %cst_11 : f32 to vector<4x1024xf32>
    %17 = arith.addf %14, %16 : vector<4x1024xf32>
    %18 = math.sqrt %17 : vector<4x1024xf32>
    %19 = arith.addf %15, %18 : vector<4x1024xf32>
    %c0_12 = arith.constant 0 : index
    %c0_13 = arith.constant 0 : index
    %20 = vector.load %arg5[%c0_12, %c0_13] : memref<4x1024xf32, #tpu.memory_space<vmem>>, vector<4x1024xf32>
    tpu.vector_store %arg5[%c0_12, %c0_13], %19 {strides = array<i32>} : memref<4x1024xf32, #tpu.memory_space<vmem>>, vector<4x1024xf32>,
    %c0_i32_14 = arith.constant 0 : i32
    %21 = arith.cmpi eq, %arg1, %c0_i32_14 : i32
    %22 = arith.extui %21 : i1 to i32
    %c0_i32_15 = arith.constant 0 : i32
    %23 = arith.cmpi ne, %22, %c0_i32_15 : i32
    scf.if %23 {
      %c0_16 = arith.constant 0 : index
      %c0_17 = arith.constant 0 : index
      %24 = vector.load %arg5[%c0_16, %c0_17] : memref<4x1024xf32, #tpu.memory_space<vmem>>, vector<4x1024xf32>
      %25 = vector.shape_cast %24 : vector<4x1024xf32> to vector<1x4x1024xf32>
      %cst_18 = arith.constant dense<0.000000e+00> : vector<1xf32>
      %26 = vector.multi_reduction <add>, %25, %cst_18 [1, 2] : vector<1x4x1024xf32> to vector<1xf32>
      %27 = vector.shape_cast %26 : vector<1xf32> to vector<1x1x1xf32>
      %28 = vector.extract %27[0, 0, 0] : f32 from vector<1x1x1xf32>
      %29 = vector.broadcast %28 : f32 to vector<1x8x128xf32>
      %c0_19 = arith.constant 0 : index
      %c0_20 = arith.constant 0 : index
      %c0_21 = arith.constant 0 : index
      %30 = vector.load %arg3[%c0_19, %c0_20, %c0_21] : memref<1x8x128xf32, #tpu.memory_space<vmem>>, vector<1x8x128xf32>
      tpu.vector_store %arg3[%c0_19, %c0_20, %c0_21], %29 {strides = array<i32>} : memref<1x8x128xf32, #tpu.memory_space<vmem>>, vector<1x8x128xf32>,
    } else {
    }
    return
  }
  func.func @transform_0(%arg0: i32, %arg1: i32) -> (i32, i32, i32) {
    %c1_i32 = arith.constant 1 : i32
    %0 = arith.muli %arg0, %c1_i32 : i32
    %1 = arith.addi %0, %arg1 : i32
    %c0_i32 = arith.constant 0 : i32
    %c0_i32_0 = arith.constant 0 : i32
    %c0_i32_1 = arith.constant 0 : i32
    return %c0_i32, %c0_i32_0, %1 : i32, i32, i32
  }
  func.func @transform_1(%arg0: i32, %arg1: i32) -> (i32, i32, i32) {
    %c0_i32 = arith.constant 0 : i32
    %c0_i32_0 = arith.constant 0 : i32
    %c0_i32_1 = arith.constant 0 : i32
    return %arg0, %c0_i32, %c0_i32_0 : i32, i32, i32
  }
  func.func @transform_2(%arg0: i32, %arg1: i32) -> (i32, i32, i32) {
    %c1_i32 = arith.constant 1 : i32
    %0 = arith.muli %arg0, %c1_i32 : i32
    %1 = arith.addi %0, %arg1 : i32
    %c0_i32 = arith.constant 0 : i32
    %c0_i32_0 = arith.constant 0 : i32
    %c0_i32_1 = arith.constant 0 : i32
    return %c0_i32, %c0_i32_0, %1 : i32, i32, i32
  }
}

</mosaic_0001>

<llo_original>
// kernel: minibatch_stddev.3
$region0: #{minibatch_stddev.3}
  #allocation0 [shape = 'u32[]', space=smem, size = 0x4, offset = 0x4, fixed_abs, tag = 'smem constant byte address 0x4 - core index']
  #allocation1 [shape = 'u32[144,128]{1,0:T(1,128)}', space=vmem, size = 0x12000, scoped, tag = 'internal scratch']
  #allocation2 [shape = 'f32[4,4,256]{2,1,0:T(4,128)}', space=vmem, size = 0x4000, scoped, tag = 'scratch operand']
  #allocation3 [shape = 's32[1]{0}', space=sflag, size = 0x4, scoped, tag = 'scratch operand']
  #allocation4 [shape = 'f32[1,1]{1,0:T(1,128)S(6)}', space=smem, size = 0x200, scoped, tag = 'scoped memory for minibatch_stddev.3']
  #allocation5 [shape = 's32[]', space=sflag, size = 0x4, offset = 0, fixed_abs, tag = 'sflag constant byte address 0x0 - dummy sync flag']
  %s0 = inlined_call_operand.<no memory space> [shape: f32[1,1], index: 0, kind: input, shape index: {}]
  %s1 = inlined_call_operand.vmem [shape: f32[4,4,1280], index: 1, kind: input, shape index: {}, may-alias: {1,2}]
  %s2 = inlined_call_operand.vmem [shape: f32[4,4,1280], index: 2, kind: output, shape index: {}, may-alias: {1,2}]
  %s3 = sld [smem:[#allocation0]]
  $region40: #{minibatch_stddev.3} parent=0
    _
  %s5 = ssub.s32 1, %s3
  %s6 = scalar_select 0, %s5, %s3
  %7 = sst [smem:[#allocation4]] %s0
  // Predicated region
  $region2: #{minibatch_stddev.3} parent=0 // pred_check
    _
  $region3: #{minibatch_stddev.3} parent=0 // pred_check_branch
    %9 = sbr.rel (0) target = $region5
  $region4: #{minibatch_stddev.3} parent=0 // pred_region
    _
  $region5: #{minibatch_stddev.3} parent=0 // pred_fallthru
    _
  %s10 = sld [smem:[#allocation4]]
  %v11 = vstv %s10
  %12 = vst [vmem:[#allocation2] sm:$0xff] %v11
  %13 = vst [vmem:[#allocation2 + $0x8] sm:$0xff] %v11
  %14 = vst [vmem:[#allocation2 + $0x10] sm:$0xff] %v11
  %15 = vst [vmem:[#allocation2 + $0x18] sm:$0xff] %v11
  %s16 = scalar_lea.vmem %s2, 32
  %p18 = scmp.lt.u32.totalorder 8, 8
  %p19 = pneg %p18
  // Predicated region
  $region6: #{minibatch_stddev.3} parent=0 // pred_check
    _
  $region7: #{minibatch_stddev.3} parent=0 // pred_check_branch
    %21 = sbr.rel (%p18) target = $region9
  $region8: #{minibatch_stddev.3} parent=0 // pred_region
    %s42 = sand.u32 8, 7
    %p43 = scmp.eq.s32.totalorder %s42, 0
    // Predicated region
    $region21: #{minibatch_stddev.3} parent=8 // pred_check
      %p44 = pneg %p43
    $region22: #{minibatch_stddev.3} parent=8 // pred_check_branch
      %46 = sbr.rel (%p44) target = $region24
    $region23: #{minibatch_stddev.3} parent=8 // pred_region
      loop: start=0, step=1, limit=1
      $region25: #{minibatch_stddev.3} parent=23 // loop_pre_header
        _
      $region26: #{minibatch_stddev.3} parent=23 // loop_header
        %s48 = sphi 0, %s52
        %p49 = scmp.ge.s32.totalorder %s48, 1
        %s53 = sphi [#allocation2], [#allocation2]
        %s54 = sphi %s16, %s16
      $region27: #{minibatch_stddev.3} parent=23 // loop_header_branch
        %51 = sbr.rel (%p49) target = $region31
      $region28: #{minibatch_stddev.3} parent=23 // loop_body
        %v55 = vld [vmem:[%s53] sm:$0xff]
        %56 = vst [vmem:[%s54] sm:$0xff] %v55
        %v57 = vld [vmem:[%s53 + $0x8] sm:$0xff]
        %58 = vst [vmem:[%s54 + $0x28] sm:$0xff] %v57
        %v59 = vld [vmem:[%s53 + $0x10] sm:$0xff]
        %60 = vst [vmem:[%s54 + $0x50] sm:$0xff] %v59
        %v61 = vld [vmem:[%s53 + $0x18] sm:$0xff]
        %62 = vst [vmem:[%s54 + $0x78] sm:$0xff] %v61
      $region29: #{minibatch_stddev.3} parent=23 // loop_footer
        %s52 = sadd.s32 1, %s48
      $region30: #{minibatch_stddev.3} parent=23 // loop_footer_branch
        %47 = sbr.rel target = $region26
      $region31: #{minibatch_stddev.3} parent=23 // loop_exit
        _
    $region24: #{minibatch_stddev.3} parent=8 // pred_fallthru
      _
    %p63 = pneg %p43
    // Predicated region
    $region32: #{minibatch_stddev.3} parent=8 // pred_check
      _
    $region33: #{minibatch_stddev.3} parent=8 // pred_check_branch
      %65 = sbr.rel (%p43) target = $region35
    $region34: #{minibatch_stddev.3} parent=8 // pred_region
      %s66 = sand.u32 8, 7
    $region35: #{minibatch_stddev.3} parent=8 // pred_fallthru
      _
  $region9: #{minibatch_stddev.3} parent=0 // pred_fallthru
    _
  // Predicated region
  $region10: #{minibatch_stddev.3} parent=0 // pred_check
    %p22 = pneg %p18
  $region11: #{minibatch_stddev.3} parent=0 // pred_check_branch
    %24 = sbr.rel (%p22) target = $region13
  $region12: #{minibatch_stddev.3} parent=0 // pred_region
    %s25 = sshllo.u32 0, 8
    loop: start=0, step=1, limit=1
    $region14: #{minibatch_stddev.3} parent=12 // loop_pre_header
      _
    $region15: #{minibatch_stddev.3} parent=12 // loop_header
      %s27 = sphi 0, %s31
      %p28 = scmp.ge.s32.totalorder %s27, 1
      %s32 = sphi [#allocation2], [#allocation2]
      %s33 = sphi %s16, %s16
    $region16: #{minibatch_stddev.3} parent=12 // loop_header_branch
      %30 = sbr.rel (%p28) target = $region20
    $region17: #{minibatch_stddev.3} parent=12 // loop_body
      %v34 = vld [vmem:[%s32] sm:%s25]
      %35 = vst [vmem:[%s33] sm:%s25] %v34
      %v36 = vld [vmem:[%s32 + $0x8] sm:%s25]
      %37 = vst [vmem:[%s33 + $0x28] sm:%s25] %v36
      %v38 = vld [vmem:[%s32 + $0x10] sm:%s25]
      %39 = vst [vmem:[%s33 + $0x50] sm:%s25] %v38
      %v40 = vld [vmem:[%s32 + $0x18] sm:%s25]
      %41 = vst [vmem:[%s33 + $0x78] sm:%s25] %v40
    $region18: #{minibatch_stddev.3} parent=12 // loop_footer
      %s31 = sadd.s32 1, %s27
    $region19: #{minibatch_stddev.3} parent=12 // loop_footer_branch
      %26 = sbr.rel target = $region15
    $region20: #{minibatch_stddev.3} parent=12 // loop_exit
      _
  $region13: #{minibatch_stddev.3} parent=0 // pred_fallthru
    _
  // Predicated region
  $region36: #{minibatch_stddev.3} parent=0 // pred_check
    _
  $region37: #{minibatch_stddev.3} parent=0 // pred_check_branch
    %69 = sbr.rel (0) target = $region39
  $region38: #{minibatch_stddev.3} parent=0 // pred_region
    %70 = vsyncadd [#allocation3], 512
  $region39: #{minibatch_stddev.3} parent=0 // pred_fallthru
    _
  %s71 = smul.u32 4, 4
  %s72 = smul.u32 %s71, 1
  %s73 = smul.u32 %s72, 2
  %s74 = sshll.u32 %s73, 4
  %75 = dma.done [#allocation3], %s74
  %76 = vsyncmov [#allocation3]
  %s77 = vpop.sfrf %76
  %p78 = scmp.eq.s32.totalorder %s77, 0
  %p79 = pneg %p78
  %81 = shalt.err (%p79)

// kernel: minibatch_stddev.2
$region0: #{minibatch_stddev.2}
  #allocation0 [shape = 'u32[]', space=smem, size = 0x4, offset = 0x4, fixed_abs, tag = 'smem constant byte address 0x4 - core index']
  #allocation1 [shape = 'u32[144,128]{1,0:T(1,128)}', space=vmem, size = 0x12000, scoped, tag = 'internal scratch']
  #allocation2 [shape = 'f32[4,1024]{1,0:T(4,128)}', space=vmem, size = 0x4000, scoped, tag = 'scratch operand']
  %s0 = inlined_call_operand.vmem [shape: f32[4,4,1024], index: 0, kind: input, shape index: {}]
  %s1 = inlined_call_operand.vmem [shape: f32[1,8,128], index: 1, kind: output, shape index: {0}]
  %s2 = inlined_call_operand.vmem [shape: f32[4,4,1280], index: 2, kind: output, shape index: {1}]
  %3 = xla_tuple %s1, %s2
  %s4 = sld [smem:[#allocation0]]
  $region92: #{minibatch_stddev.2} parent=0
    _
  %s6 = ssub.s32 1, %s4
  %s7 = scalar_select 0, %s6, %s4
  $region1: #{minibatch_stddev.2} parent=0
    #allocation3 [shape = 'u8[65536]{0}', space=vmem, size = 0x10000, scoped, tag = 'output window, operand 1, single buffered']
    // Predicated region
    $region2: #{minibatch_stddev.2} parent=1 // pred_check
      _
    $region3: #{minibatch_stddev.2} parent=1 // pred_check_branch
      %9 = sbr.rel (0) target = $region5
    $region4: #{minibatch_stddev.2} parent=1 // pred_region
      %s10 = sadd.s32 0, 0
      %s11 = smul.u32 8, %s10
      %p12 = scmp.lt.s32.totalorder %s11, 7
      %s13 = scalar_select %p12, %s11, 7
      %s14 = smul.addr %s13, 4
      %s15 = scalar_lea.vmem %s0, %s14
      %s16 = sadd.s32 0, 0
      %s17 = smul.u32 8, %s16
    $region5: #{minibatch_stddev.2} parent=1 // pred_fallthru
      _
    %s18 = sadd.s32 0, 0
    %s19 = smul.u32 8, %s18
    %p20 = scmp.lt.s32.totalorder %s19, 7
    %s21 = scalar_select %p20, %s19, 7
    %s22 = smul.addr %s21, 4
    %s23 = scalar_lea.vmem %s0, %s22
    %s24 = sadd.s32 0, 0
    %s25 = smul.u32 8, %s24
    %p26 = scmp.lt.s32.totalorder %s25, 7
    %s27 = scalar_select %p26, %s25, 7
    %s28 = smul.addr %s27, 4
    %s29 = scalar_lea.vmem %s0, %s28
    %s30 = sadd.s32 0, 0
    %s31 = smul.u32 8, %s30
    %s32 = sadd.s32 0, 0
    %s33 = smul.u32 8, %s32
    %s34 = ssub.s32 10, %s33
    %p35 = scmp.lt.s32.totalorder %s34, 8
    %s36 = scalar_select %p35, %s34, 8
    %s37 = smul.u32 256, %s36
    %p38 = scmp.eq.s32.totalorder 0, 0
    // Predicated region
    $region6: #{minibatch_stddev.2} parent=1 // pred_check
      %p39 = pneg %p38
    $region7: #{minibatch_stddev.2} parent=1 // pred_check_branch
      %41 = sbr.rel (%p39) target = $region9
    $region8: #{minibatch_stddev.2} parent=1 // pred_region
      %42 = vst [vmem:[#allocation2] sm:$0xff] 0.0
      %43 = vst [vmem:[#allocation2 + $0x8] sm:$0xff] 0.0
      %44 = vst [vmem:[#allocation2 + $0x10] sm:$0xff] 0.0
      %45 = vst [vmem:[#allocation2 + $0x18] sm:$0xff] 0.0
    $region9: #{minibatch_stddev.2} parent=1 // pred_fallthru
      _
    %v46 = vld [vmem:[%s29] sm:$0xff]
    %v47 = vld [vmem:[%s29 + $0x8] sm:$0xff]
    %v48 = vld [vmem:[%s29 + $0x10] sm:$0xff]
    %v49 = vld [vmem:[%s29 + $0x18] sm:$0xff]
    %v50 = vld [vmem:[%s29 + $0x20] sm:$0xff]
    %v51 = vld [vmem:[%s29 + $0x28] sm:$0xff]
    %v52 = vld [vmem:[%s29 + $0x30] sm:$0xff]
    %v53 = vld [vmem:[%s29 + $0x38] sm:$0xff]
    %v54 = vld [vmem:[%s29 + $0x40] sm:$0xff]
    %v55 = vld [vmem:[%s29 + $0x48] sm:$0xff]
    %v56 = vld [vmem:[%s29 + $0x50] sm:$0xff]
    %v57 = vld [vmem:[%s29 + $0x58] sm:$0xff]
    %v58 = vld [vmem:[%s29 + $0x60] sm:$0xff]
    %v59 = vld [vmem:[%s29 + $0x68] sm:$0xff]
    %v60 = vld [vmem:[%s29 + $0x70] sm:$0xff]
    %v61 = vld [vmem:[%s29 + $0x78] sm:$0xff]
    %62 = vst [vmem:[#allocation3] sm:$0xff] %v46
    %63 = vst [vmem:[#allocation3 + $0x8] sm:$0xff] %v47
    %64 = vst [vmem:[#allocation3 + $0x10] sm:$0xff] %v48
    %65 = vst [vmem:[#allocation3 + $0x18] sm:$0xff] %v49
    %66 = vst [vmem:[#allocation3 + $0x20] sm:$0xff] %v50
    %67 = vst [vmem:[#allocation3 + $0x28] sm:$0xff] %v51
    %68 = vst [vmem:[#allocation3 + $0x30] sm:$0xff] %v52
    %69 = vst [vmem:[#allocation3 + $0x38] sm:$0xff] %v53
    %70 = vst [vmem:[#allocation3 + $0x40] sm:$0xff] %v54
    %71 = vst [vmem:[#allocation3 + $0x48] sm:$0xff] %v55
    %72 = vst [vmem:[#allocation3 + $0x50] sm:$0xff] %v56
    %73 = vst [vmem:[#allocation3 + $0x58] sm:$0xff] %v57
    %74 = vst [vmem:[#allocation3 + $0x60] sm:$0xff] %v58
    %75 = vst [vmem:[#allocation3 + $0x68] sm:$0xff] %v59
    %76 = vst [vmem:[#allocation3 + $0x70] sm:$0xff] %v60
    %77 = vst [vmem:[#allocation3 + $0x78] sm:$0xff] %v61
    %v94 = vcombine.high %v46, %v46
    %v95 = vcombine.high %v47, %v47
    %v96 = vcombine.high %v48, %v48
    %v97 = vcombine.high %v49, %v49
    %v98 = vcombine.high %v50, %v50
    %v99 = vcombine.high %v51, %v51
    %v100 = vcombine.high %v52, %v52
    %v101 = vcombine.high %v53, %v53
    %v102 = vcombine.high %v54, %v54
    %v103 = vcombine.high %v55, %v55
    %v104 = vcombine.high %v56, %v56
    %v105 = vcombine.high %v57, %v57
    %v106 = vcombine.high %v58, %v58
    %v107 = vcombine.high %v59, %v59
    %v108 = vcombine.high %v60, %v60
    %v109 = vcombine.high %v61, %v61
    %vm126 = vcmask 1043456
    %v127 = vsel %vm126, %v46, 0.0
    %v128 = vsel %vm126, %v50, 0.0
    %v129 = vadd.f32 %v127, %v128
    %v130 = vsel %vm126, %v54, 0.0
    %v131 = vadd.f32 %v129, %v130
    %v132 = vsel %vm126, %v58, 0.0
    %v133 = vadd.f32 %v131, %v132
    %v134 = vsel %vm126, %v94, 0.0
    %v135 = vsel %vm126, %v98, 0.0
    %v136 = vadd.f32 %v134, %v135
    %v137 = vsel %vm126, %v102, 0.0
    %v138 = vadd.f32 %v136, %v137
    %v139 = vsel %vm126, %v106, 0.0
    %v140 = vadd.f32 %v138, %v139
    %v141 = vsel %vm126, %v47, 0.0
    %v142 = vsel %vm126, %v51, 0.0
    %v143 = vadd.f32 %v141, %v142
    %v144 = vsel %vm126, %v55, 0.0
    %v145 = vadd.f32 %v143, %v144
    %v146 = vsel %vm126, %v59, 0.0
    %v147 = vadd.f32 %v145, %v146
    %v148 = vsel %vm126, %v95, 0.0
    %v149 = vsel %vm126, %v99, 0.0
    %v150 = vadd.f32 %v148, %v149
    %v151 = vsel %vm126, %v103, 0.0
    %v152 = vadd.f32 %v150, %v151
    %v153 = vsel %vm126, %v107, 0.0
    %v154 = vadd.f32 %v152, %v153
    %v155 = vsel %vm126, %v48, 0.0
    %v156 = vsel %vm126, %v52, 0.0
    %v157 = vadd.f32 %v155, %v156
    %v158 = vsel %vm126, %v56, 0.0
    %v159 = vadd.f32 %v157, %v158
    %v160 = vsel %vm126, %v60, 0.0
    %v161 = vadd.f32 %v159, %v160
    %v162 = vsel %vm126, %v96, 0.0
    %v163 = vsel %vm126, %v100, 0.0
    %v164 = vadd.f32 %v162, %v163
    %v165 = vsel %vm126, %v104, 0.0
    %v166 = vadd.f32 %v164, %v165
    %v167 = vsel %vm126, %v108, 0.0
    %v168 = vadd.f32 %v166, %v167
    %v169 = vsel %vm126, %v49, 0.0
    %v170 = vsel %vm126, %v53, 0.0
    %v171 = vadd.f32 %v169, %v170
    %v172 = vsel %vm126, %v57, 0.0
    %v173 = vadd.f32 %v171, %v172
    %v174 = vsel %vm126, %v61, 0.0
    %v175 = vadd.f32 %v173, %v174
    %v176 = vsel %vm126, %v97, 0.0
    %v177 = vsel %vm126, %v101, 0.0
    %v178 = vadd.f32 %v176, %v177
    %v179 = vsel %vm126, %v105, 0.0
    %v180 = vadd.f32 %v178, %v179
    %v181 = vsel %vm126, %v109, 0.0
    %v182 = vadd.f32 %v180, %v181
    %v183 = vrcp.pop 4.0
    %v184 = vmul.f32 %v133, %v183
    %v185 = vmul.f32 %v140, %v183
    %v186 = vmul.f32 %v147, %v183
    %v187 = vmul.f32 %v154, %v183
    %v188 = vmul.f32 %v161, %v183
    %v189 = vmul.f32 %v168, %v183
    %v190 = vmul.f32 %v175, %v183
    %v191 = vmul.f32 %v182, %v183
    %v200 = vcombine.low %v184, %v185
    %v201 = vcombine.low %v186, %v187
    %v202 = vcombine.low %v188, %v189
    %v203 = vcombine.low %v190, %v191
    %v208 = vsub.f32 %v46, %v200
    %v209 = vsub.f32 %v47, %v201
    %v210 = vsub.f32 %v48, %v202
    %v211 = vsub.f32 %v49, %v203
    %v212 = vsub.f32 %v50, %v200
    %v213 = vsub.f32 %v51, %v201
    %v214 = vsub.f32 %v52, %v202
    %v215 = vsub.f32 %v53, %v203
    %v216 = vsub.f32 %v54, %v200
    %v217 = vsub.f32 %v55, %v201
    %v218 = vsub.f32 %v56, %v202
    %v219 = vsub.f32 %v57, %v203
    %v220 = vsub.f32 %v58, %v200
    %v221 = vsub.f32 %v59, %v201
    %v222 = vsub.f32 %v60, %v202
    %v223 = vsub.f32 %v61, %v203
    %v224 = vmul.f32 %v208, %v208
    %v225 = vmul.f32 %v209, %v209
    %v226 = vmul.f32 %v210, %v210
    %v227 = vmul.f32 %v211, %v211
    %v228 = vmul.f32 %v212, %v212
    %v229 = vmul.f32 %v213, %v213
    %v230 = vmul.f32 %v214, %v214
    %v231 = vmul.f32 %v215, %v215
    %v232 = vmul.f32 %v216, %v216
    %v233 = vmul.f32 %v217, %v217
    %v234 = vmul.f32 %v218, %v218
    %v235 = vmul.f32 %v219, %v219
    %v236 = vmul.f32 %v220, %v220
    %v237 = vmul.f32 %v221, %v221
    %v238 = vmul.f32 %v222, %v222
    %v239 = vmul.f32 %v223, %v223
    %v256 = vcombine.high %v224, %v224
    %v257 = vcombine.high %v225, %v225
    %v258 = vcombine.high %v226, %v226
    %v259 = vcombine.high %v227, %v227
    %v260 = vcombine.high %v228, %v228
    %v261 = vcombine.high %v229, %v229
    %v262 = vcombine.high %v230, %v230
    %v263 = vcombine.high %v231, %v231
    %v264 = vcombine.high %v232, %v232
    %v265 = vcombine.high %v233, %v233
    %v266 = vcombine.high %v234, %v234
    %v267 = vcombine.high %v235, %v235
    %v268 = vcombine.high %v236, %v236
    %v269 = vcombine.high %v237, %v237
    %v270 = vcombine.high %v238, %v238
    %v271 = vcombine.high %v239, %v239
    %v288 = vsel %vm126, %v224, 0.0
    %v289 = vsel %vm126, %v228, 0.0
    %v290 = vadd.f32 %v288, %v289
    %v291 = vsel %vm126, %v232, 0.0
    %v292 = vadd.f32 %v290, %v291
    %v293 = vsel %vm126, %v236, 0.0
    %v294 = vadd.f32 %v292, %v293
    %v295 = vsel %vm126, %v256, 0.0
    %v296 = vsel %vm126, %v260, 0.0
    %v297 = vadd.f32 %v295, %v296
    %v298 = vsel %vm126, %v264, 0.0
    %v299 = vadd.f32 %v297, %v298
    %v300 = vsel %vm126, %v268, 0.0
    %v301 = vadd.f32 %v299, %v300
    %v302 = vsel %vm126, %v225, 0.0
    %v303 = vsel %vm126, %v229, 0.0
    %v304 = vadd.f32 %v302, %v303
    %v305 = vsel %vm126, %v233, 0.0
    %v306 = vadd.f32 %v304, %v305
    %v307 = vsel %vm126, %v237, 0.0
    %v308 = vadd.f32 %v306, %v307
    %v309 = vsel %vm126, %v257, 0.0
    %v310 = vsel %vm126, %v261, 0.0
    %v311 = vadd.f32 %v309, %v310
    %v312 = vsel %vm126, %v265, 0.0
    %v313 = vadd.f32 %v311, %v312
    %v314 = vsel %vm126, %v269, 0.0
    %v315 = vadd.f32 %v313, %v314
    %v316 = vsel %vm126, %v226, 0.0
    %v317 = vsel %vm126, %v230, 0.0
    %v318 = vadd.f32 %v316, %v317
    %v319 = vsel %vm126, %v234, 0.0
    %v320 = vadd.f32 %v318, %v319
    %v321 = vsel %vm126, %v238, 0.0
    %v322 = vadd.f32 %v320, %v321
    %v323 = vsel %vm126, %v258, 0.0
    %v324 = vsel %vm126, %v262, 0.0
    %v325 = vadd.f32 %v323, %v324
    %v326 = vsel %vm126, %v266, 0.0
    %v327 = vadd.f32 %v325, %v326
    %v328 = vsel %vm126, %v270, 0.0
    %v329 = vadd.f32 %v327, %v328
    %v330 = vsel %vm126, %v227, 0.0
    %v331 = vsel %vm126, %v231, 0.0
    %v332 = vadd.f32 %v330, %v331
    %v333 = vsel %vm126, %v235, 0.0
    %v334 = vadd.f32 %v332, %v333
    %v335 = vsel %vm126, %v239, 0.0
    %v336 = vadd.f32 %v334, %v335
    %v337 = vsel %vm126, %v259, 0.0
    %v338 = vsel %vm126, %v263, 0.0
    %v339 = vadd.f32 %v337, %v338
    %v340 = vsel %vm126, %v267, 0.0
    %v341 = vadd.f32 %v339, %v340
    %v342 = vsel %vm126, %v271, 0.0
    %v343 = vadd.f32 %v341, %v342
    %v344 = vmul.f32 %v294, 0.33333334
    %v345 = vmul.f32 %v301, 0.33333334
    %v346 = vmul.f32 %v308, 0.33333334
    %v347 = vmul.f32 %v315, 0.33333334
    %v348 = vmul.f32 %v322, 0.33333334
    %v349 = vmul.f32 %v329, 0.33333334
    %v350 = vmul.f32 %v336, 0.33333334
    %v351 = vmul.f32 %v343, 0.33333334
    %v352 = vld [vmem:[#allocation2] sm:$0xff]
    %v353 = vld [vmem:[#allocation2 + $0x8] sm:$0xff]
    %v354 = vld [vmem:[#allocation2 + $0x10] sm:$0xff]
    %v355 = vld [vmem:[#allocation2 + $0x18] sm:$0xff]
    %v356 = vadd.f32 %v344, 1e-08
    %v357 = vadd.f32 %v345, 1e-08
    %v358 = vadd.f32 %v346, 1e-08
    %v359 = vadd.f32 %v347, 1e-08
    %v360 = vadd.f32 %v348, 1e-08
    %v361 = vadd.f32 %v349, 1e-08
    %v362 = vadd.f32 %v350, 1e-08
    %v363 = vadd.f32 %v351, 1e-08
    %v364 = vrsqrt.pop %v356
    %v365 = vmul.f32 %v356, %v364
    %vm366 = vcmp.eq.f32.partialorder %v356, inf
    %v367 = vsel %vm366, %v356, %v365
    %vm368 = vcmp.eq.f32.partialorder %v356, 0.0
    %v369 = vand.u32 %v356, 2147483648
    %v370 = vsel %vm368, %v369, %v367
    %v371 = vrsqrt.pop %v357
    %v372 = vmul.f32 %v357, %v371
    %vm373 = vcmp.eq.f32.partialorder %v357, inf
    %v374 = vsel %vm373, %v357, %v372
    %vm375 = vcmp.eq.f32.partialorder %v357, 0.0
    %v376 = vand.u32 %v357, 2147483648
    %v377 = vsel %vm375, %v376, %v374
    %v378 = vrsqrt.pop %v358
    %v379 = vmul.f32 %v358, %v378
    %vm380 = vcmp.eq.f32.partialorder %v358, inf
    %v381 = vsel %vm380, %v358, %v379
    %vm382 = vcmp.eq.f32.partialorder %v358, 0.0
    %v383 = vand.u32 %v358, 2147483648
    %v384 = vsel %vm382, %v383, %v381
    %v385 = vrsqrt.pop %v359
    %v386 = vmul.f32 %v359, %v385
    %vm387 = vcmp.eq.f32.partialorder %v359, inf
    %v388 = vsel %vm387, %v359, %v386
    %vm389 = vcmp.eq.f32.partialorder %v359, 0.0
    %v390 = vand.u32 %v359, 2147483648
    %v391 = vsel %vm389, %v390, %v388
    %v392 = vrsqrt.pop %v360
    %v393 = vmul.f32 %v360, %v392
    %vm394 = vcmp.eq.f32.partialorder %v360, inf
    %v395 = vsel %vm394, %v360, %v393
    %vm396 = vcmp.eq.f32.partialorder %v360, 0.0
    %v397 = vand.u32 %v360, 2147483648
    %v398 = vsel %vm396, %v397, %v395
    %v399 = vrsqrt.pop %v361
    %v400 = vmul.f32 %v361, %v399
    %vm401 = vcmp.eq.f32.partialorder %v361, inf
    %v402 = vsel %vm401, %v361, %v400
    %vm403 = vcmp.eq.f32.partialorder %v361, 0.0
    %v404 = vand.u32 %v361, 2147483648
    %v405 = vsel %vm403, %v404, %v402
    %v406 = vrsqrt.pop %v362
    %v407 = vmul.f32 %v362, %v406
    %vm408 = vcmp.eq.f32.partialorder %v362, inf
    %v409 = vsel %vm408, %v362, %v407
    %vm410 = vcmp.eq.f32.partialorder %v362, 0.0
    %v411 = vand.u32 %v362, 2147483648
    %v412 = vsel %vm410, %v411, %v409
    %v413 = vrsqrt.pop %v363
    %v414 = vmul.f32 %v363, %v413
    %vm415 = vcmp.eq.f32.partialorder %v363, inf
    %v416 = vsel %vm415, %v363, %v414
    %vm417 = vcmp.eq.f32.partialorder %v363, 0.0
    %v418 = vand.u32 %v363, 2147483648
    %v419 = vsel %vm417, %v418, %v416
    %v428 = vcombine.low %v370, %v377
    %v429 = vcombine.low %v384, %v391
    %v430 = vcombine.low %v398, %v405
    %v431 = vcombine.low %v412, %v419
    %v436 = vadd.f32 %v352, %v428
    %v437 = vadd.f32 %v353, %v429
    %v438 = vadd.f32 %v354, %v430
    %v439 = vadd.f32 %v355, %v431
    %440 = vst [vmem:[#allocation2] sm:$0xff] %v436
    %441 = vst [vmem:[#allocation2 + $0x8] sm:$0xff] %v437
    %442 = vst [vmem:[#allocation2 + $0x10] sm:$0xff] %v438
    %443 = vst [vmem:[#allocation2 + $0x18] sm:$0xff] %v439
    // Predicated region
    $region10: #{minibatch_stddev.2} parent=1 // pred_check
      %p444 = pneg %p38
    $region11: #{minibatch_stddev.2} parent=1 // pred_check_branch
      %446 = sbr.rel (%p444) target = $region13
    $region12: #{minibatch_stddev.2} parent=1 // pred_region
      %v447 = vld [vmem:[#allocation2] sm:$0xff]
      %v448 = vld [vmem:[#allocation2 + $0x8] sm:$0xff]
      %v449 = vld [vmem:[#allocation2 + $0x10] sm:$0xff]
      %v450 = vld [vmem:[#allocation2 + $0x18] sm:$0xff]
      %v455 = vcombine.high %v447, %v447
      %v456 = vcombine.high %v448, %v448
      %v457 = vcombine.high %v449, %v449
      %v458 = vcombine.high %v450, %v450
      %v463 = vsel %vm126, %v447, 0.0
      %v464 = vsel %vm126, %v455, 0.0
      %v465 = vadd.f32 %v463, %v464
      %v466 = vsel %vm126, %v448, 0.0
      %v467 = vadd.f32 %v465, %v466
      %v468 = vsel %vm126, %v456, 0.0
      %v469 = vadd.f32 %v467, %v468
      %v470 = vsel %vm126, %v449, 0.0
      %v471 = vadd.f32 %v469, %v470
      %v472 = vsel %vm126, %v457, 0.0
      %v473 = vadd.f32 %v471, %v472
      %v474 = vsel %vm126, %v450, 0.0
      %v475 = vadd.f32 %v473, %v474
      %v476 = vsel %vm126, %v458, 0.0
      %v477 = vadd.f32 %v475, %v476
      %478 = vadd.xlane.f32.xlu0 %v477
      %v479 = vpop.xlane.xlu0 %478
      %v480 = vrot.slane %v479, 4
      %v481 = vadd.f32 %v479, %v480
      %v482 = vrot.slane %v481, 2
      %v483 = vadd.f32 %v481, %v482
      %v484 = vrot.slane %v483, 1
      %v485 = vadd.f32 %v483, %v484
      %s486 = vtos %v485
      %v487 = vstv %s486
      %488 = vst [vmem:[%s1] sm:$0xff] %v487
    $region13: #{minibatch_stddev.2} parent=1 // pred_fallthru
      _
    // Predicated region
    $region14: #{minibatch_stddev.2} parent=1 // pred_check
      _
    $region15: #{minibatch_stddev.2} parent=1 // pred_check_branch
      %490 = sbr.rel (0) target = $region17
    $region16: #{minibatch_stddev.2} parent=1 // pred_region
      _
    $region17: #{minibatch_stddev.2} parent=1 // pred_fallthru
      _
    // Predicated region
    $region18: #{minibatch_stddev.2} parent=1 // pred_check
      _
    $region19: #{minibatch_stddev.2} parent=1 // pred_check_branch
      %492 = sbr.rel (0) target = $region21
    $region20: #{minibatch_stddev.2} parent=1 // pred_region
      %s493 = sadd.s32 0, 0
      %s494 = smul.u32 8, %s493
      %s495 = ssub.s32 10, %s494
      %p496 = scmp.lt.s32.totalorder %s495, 8
      %s497 = scalar_select %p496, %s495, 8
      %s498 = smul.u32 256, %s497
      %p499 = scmp.ne.s32.totalorder 0, %s498
      %s500 = smul.addr %s494, 4
      %s501 = scalar_lea.vmem %s2, %s500
      %s502 = smul.u32 %s497, 4
      // Predicated region
      $region22: #{minibatch_stddev.2} parent=20 // pred_check
        %p503 = pneg %p499
      $region23: #{minibatch_stddev.2} parent=20 // pred_check_branch
        %505 = sbr.rel (%p503) target = $region25
      $region24: #{minibatch_stddev.2} parent=20 // pred_region
        %p506 = scmp.lt.u32.totalorder %s502, 8
        %p507 = pneg %p506
        // Predicated region
        $region26: #{minibatch_stddev.2} parent=24 // pred_check
          _
        $region27: #{minibatch_stddev.2} parent=24 // pred_check_branch
          %509 = sbr.rel (%p506) target = $region29
        $region28: #{minibatch_stddev.2} parent=24 // pred_region
          %s530 = sand.u32 %s502, 7
          %p531 = scmp.eq.s32.totalorder %s530, 0
          // Predicated region
          $region41: #{minibatch_stddev.2} parent=28 // pred_check
            %p532 = pneg %p531
          $region42: #{minibatch_stddev.2} parent=28 // pred_check_branch
            %534 = sbr.rel (%p532) target = $region44
          $region43: #{minibatch_stddev.2} parent=28 // pred_region
            %s535 = sshrl.u32 %s502, 3
            %s536 = sshrl.u32 %s535, 4
            // While loop
            $region45: #{minibatch_stddev.2} parent=43 // loop_pre_header
              _
            $region46: #{minibatch_stddev.2} parent=43 // loop_header
              %s540 = sphi 0, %s542
              %p541 = scmp.ge.s32.totalorder %s540, %s536
              %s545 = sphi 0, %s678
              %s546 = sphi [#allocation3], %s681
              %s547 = sphi %s501, %s682
            $region47: #{minibatch_stddev.2} parent=43 // loop_header_branch
              %544 = sbr.rel (%p541) target = $region51
            $region48: #{minibatch_stddev.2} parent=43 // loop_body
              %v548 = vld [vmem:[%s546] sm:$0xff]
              %549 = vst [vmem:[%s547] sm:$0xff] %v548
              %v550 = vld [vmem:[%s546 + $0x8] sm:$0xff]
              %551 = vst [vmem:[%s547 + $0x8] sm:$0xff] %v550
              %v552 = vld [vmem:[%s546 + $0x10] sm:$0xff]
              %553 = vst [vmem:[%s547 + $0x10] sm:$0xff] %v552
              %v554 = vld [vmem:[%s546 + $0x18] sm:$0xff]
              %555 = vst [vmem:[%s547 + $0x18] sm:$0xff] %v554
              %v556 = vld [vmem:[%s546 + $0x20] sm:$0xff]
              %557 = vst [vmem:[%s547 + $0x20] sm:$0xff] %v556
              %v558 = vld [vmem:[%s546 + $0x28] sm:$0xff]
              %559 = vst [vmem:[%s547 + $0x28] sm:$0xff] %v558
              %v560 = vld [vmem:[%s546 + $0x30] sm:$0xff]
              %561 = vst [vmem:[%s547 + $0x30] sm:$0xff] %v560
              %v562 = vld [vmem:[%s546 + $0x38] sm:$0xff]
              %563 = vst [vmem:[%s547 + $0x38] sm:$0xff] %v562
              %v564 = vld [vmem:[%s546 + $0x40] sm:$0xff]
              %565 = vst [vmem:[%s547 + $0x40] sm:$0xff] %v564
              %v566 = vld [vmem:[%s546 + $0x48] sm:$0xff]
              %567 = vst [vmem:[%s547 + $0x48] sm:$0xff] %v566
              %v568 = vld [vmem:[%s546 + $0x50] sm:$0xff]
              %569 = vst [vmem:[%s547 + $0x50] sm:$0xff] %v568
              %v570 = vld [vmem:[%s546 + $0x58] sm:$0xff]
              %571 = vst [vmem:[%s547 + $0x58] sm:$0xff] %v570
              %v572 = vld [vmem:[%s546 + $0x60] sm:$0xff]
              %573 = vst [vmem:[%s547 + $0x60] sm:$0xff] %v572
              %v574 = vld [vmem:[%s546 + $0x68] sm:$0xff]
              %575 = vst [vmem:[%s547 + $0x68] sm:$0xff] %v574
              %v576 = vld [vmem:[%s546 + $0x70] sm:$0xff]
              %577 = vst [vmem:[%s547 + $0x70] sm:$0xff] %v576
              %v578 = vld [vmem:[%s546 + $0x78] sm:$0xff]
              %579 = vst [vmem:[%s547 + $0x78] sm:$0xff] %v578
              %v580 = vld [vmem:[%s546 + $0x20] sm:$0xff]
              %581 = vst [vmem:[%s547 + $0x28] sm:$0xff] %v580
              %v582 = vld [vmem:[%s546 + $0x28] sm:$0xff]
              %583 = vst [vmem:[%s547 + $0x30] sm:$0xff] %v582
              %v584 = vld [vmem:[%s546 + $0x30] sm:$0xff]
              %585 = vst [vmem:[%s547 + $0x38] sm:$0xff] %v584
              %v586 = vld [vmem:[%s546 + $0x38] sm:$0xff]
              %587 = vst [vmem:[%s547 + $0x40] sm:$0xff] %v586
              %v588 = vld [vmem:[%s546 + $0x40] sm:$0xff]
              %589 = vst [vmem:[%s547 + $0x48] sm:$0xff] %v588
              %v590 = vld [vmem:[%s546 + $0x48] sm:$0xff]
              %591 = vst [vmem:[%s547 + $0x50] sm:$0xff] %v590
              %v592 = vld [vmem:[%s546 + $0x50] sm:$0xff]
              %593 = vst [vmem:[%s547 + $0x58] sm:$0xff] %v592
              %v594 = vld [vmem:[%s546 + $0x58] sm:$0xff]
              %595 = vst [vmem:[%s547 + $0x60] sm:$0xff] %v594
              %v596 = vld [vmem:[%s546 + $0x60] sm:$0xff]
              %597 = vst [vmem:[%s547 + $0x68] sm:$0xff] %v596
              %v598 = vld [vmem:[%s546 + $0x68] sm:$0xff]
              %599 = vst [vmem:[%s547 + $0x70] sm:$0xff] %v598
              %v600 = vld [vmem:[%s546 + $0x70] sm:$0xff]
              %601 = vst [vmem:[%s547 + $0x78] sm:$0xff] %v600
              %v602 = vld [vmem:[%s546 + $0x78] sm:$0xff]
              %603 = vst [vmem:[%s547 + $0x80] sm:$0xff] %v602
              %v604 = vld [vmem:[%s546 + $0x80] sm:$0xff]
              %605 = vst [vmem:[%s547 + $0x88] sm:$0xff] %v604
              %v606 = vld [vmem:[%s546 + $0x88] sm:$0xff]
              %607 = vst [vmem:[%s547 + $0x90] sm:$0xff] %v606
              %v608 = vld [vmem:[%s546 + $0x90] sm:$0xff]
              %609 = vst [vmem:[%s547 + $0x98] sm:$0xff] %v608
              %v610 = vld [vmem:[%s546 + $0x98] sm:$0xff]
              %611 = vst [vmem:[%s547 + $0xa0] sm:$0xff] %v610
              %v612 = vld [vmem:[%s546 + $0x40] sm:$0xff]
              %613 = vst [vmem:[%s547 + $0x50] sm:$0xff] %v612
              %v614 = vld [vmem:[%s546 + $0x48] sm:$0xff]
              %615 = vst [vmem:[%s547 + $0x58] sm:$0xff] %v614
              %v616 = vld [vmem:[%s546 + $0x50] sm:$0xff]
              %617 = vst [vmem:[%s547 + $0x60] sm:$0xff] %v616
              %v618 = vld [vmem:[%s546 + $0x58] sm:$0xff]
              %619 = vst [vmem:[%s547 + $0x68] sm:$0xff] %v618
              %v620 = vld [vmem:[%s546 + $0x60] sm:$0xff]
              %621 = vst [vmem:[%s547 + $0x70] sm:$0xff] %v620
              %v622 = vld [vmem:[%s546 + $0x68] sm:$0xff]
              %623 = vst [vmem:[%s547 + $0x78] sm:$0xff] %v622
              %v624 = vld [vmem:[%s546 + $0x70] sm:$0xff]
              %625 = vst [vmem:[%s547 + $0x80] sm:$0xff] %v624
              %v626 = vld [vmem:[%s546 + $0x78] sm:$0xff]
              %627 = vst [vmem:[%s547 + $0x88] sm:$0xff] %v626
              %v628 = vld [vmem:[%s546 + $0x80] sm:$0xff]
              %629 = vst [vmem:[%s547 + $0x90] sm:$0xff] %v628
              %v630 = vld [vmem:[%s546 + $0x88] sm:$0xff]
              %631 = vst [vmem:[%s547 + $0x98] sm:$0xff] %v630
              %v632 = vld [vmem:[%s546 + $0x90] sm:$0xff]
              %633 = vst [vmem:[%s547 + $0xa0] sm:$0xff] %v632
              %v634 = vld [vmem:[%s546 + $0x98] sm:$0xff]
              %635 = vst [vmem:[%s547 + $0xa8] sm:$0xff] %v634
              %v636 = vld [vmem:[%s546 + $0xa0] sm:$0xff]
              %637 = vst [vmem:[%s547 + $0xb0] sm:$0xff] %v636
              %v638 = vld [vmem:[%s546 + $0xa8] sm:$0xff]
              %639 = vst [vmem:[%s547 + $0xb8] sm:$0xff] %v638
              %v640 = vld [vmem:[%s546 + $0xb0] sm:$0xff]
              %641 = vst [vmem:[%s547 + $0xc0] sm:$0xff] %v640
              %v642 = vld [vmem:[%s546 + $0xb8] sm:$0xff]
              %643 = vst [vmem:[%s547 + $0xc8] sm:$0xff] %v642
              %v644 = vld [vmem:[%s546 + $0x60] sm:$0xff]
              %645 = vst [vmem:[%s547 + $0x78] sm:$0xff] %v644
              %v646 = vld [vmem:[%s546 + $0x68] sm:$0xff]
              %647 = vst [vmem:[%s547 + $0x80] sm:$0xff] %v646
              %v648 = vld [vmem:[%s546 + $0x70] sm:$0xff]
              %649 = vst [vmem:[%s547 + $0x88] sm:$0xff] %v648
              %v650 = vld [vmem:[%s546 + $0x78] sm:$0xff]
              %651 = vst [vmem:[%s547 + $0x90] sm:$0xff] %v650
              %v652 = vld [vmem:[%s546 + $0x80] sm:$0xff]
              %653 = vst [vmem:[%s547 + $0x98] sm:$0xff] %v652
              %v654 = vld [vmem:[%s546 + $0x88] sm:$0xff]
              %655 = vst [vmem:[%s547 + $0xa0] sm:$0xff] %v654
              %v656 = vld [vmem:[%s546 + $0x90] sm:$0xff]
              %657 = vst [vmem:[%s547 + $0xa8] sm:$0xff] %v656
              %v658 = vld [vmem:[%s546 + $0x98] sm:$0xff]
              %659 = vst [vmem:[%s547 + $0xb0] sm:$0xff] %v658
              %v660 = vld [vmem:[%s546 + $0xa0] sm:$0xff]
              %661 = vst [vmem:[%s547 + $0xb8] sm:$0xff] %v660
              %v662 = vld [vmem:[%s546 + $0xa8] sm:$0xff]
              %663 = vst [vmem:[%s547 + $0xc0] sm:$0xff] %v662
              %v664 = vld [vmem:[%s546 + $0xb0] sm:$0xff]
              %665 = vst [vmem:[%s547 + $0xc8] sm:$0xff] %v664
              %v666 = vld [vmem:[%s546 + $0xb8] sm:$0xff]
              %667 = vst [vmem:[%s547 + $0xd0] sm:$0xff] %v666
              %v668 = vld [vmem:[%s546 + $0xc0] sm:$0xff]
              %669 = vst [vmem:[%s547 + $0xd8] sm:$0xff] %v668
              %v670 = vld [vmem:[%s546 + $0xc8] sm:$0xff]
              %671 = vst [vmem:[%s547 + $0xe0] sm:$0xff] %v670
              %v672 = vld [vmem:[%s546 + $0xd0] sm:$0xff]
              %673 = vst [vmem:[%s547 + $0xe8] sm:$0xff] %v672
              %v674 = vld [vmem:[%s546 + $0xd8] sm:$0xff]
              %675 = vst [vmem:[%s547 + $0xf0] sm:$0xff] %v674
              %s676 = sadd.s32 1, %s545
              %p677 = scmp.ge.s32.totalorder %s676, %s536
              %s678 = scalar_select %p677, 0, %s676
              %s679 = smul.u32 %s678, 128
              %s680 = smul.u32 %s678, 128
              %s681 = scalar_lea.vmem [#allocation3], %s679
              %s682 = scalar_lea.vmem %s501, %s680
            $region49: #{minibatch_stddev.2} parent=43 // loop_footer
              %s542 = sadd.s32 %s540, 1
            $region50: #{minibatch_stddev.2} parent=43 // loop_footer_branch
              %539 = sbr.rel target = $region46
            $region51: #{minibatch_stddev.2} parent=43 // loop_exit
              _
            %s683 = sshrl.u32 %s535, 4
            %s684 = sand.u32 %s535, 15
            %s685 = smul.u32 %s683, 16
            %s686 = smul.u32 128, %s685
            %s687 = sshra.s32 %s686, 4
            %s688 = scalar_lea.vmem [#allocation3], %s687
            %s689 = smul.u32 128, %s685
            %s690 = sshra.s32 %s689, 4
            %s691 = scalar_lea.vmem %s501, %s690
            // While loop
            $region52: #{minibatch_stddev.2} parent=43 // loop_pre_header
              _
            $region53: #{minibatch_stddev.2} parent=43 // loop_header
              %s695 = sphi 0, %s697
              %p696 = scmp.ge.s32.totalorder %s695, %s684
              %s700 = sphi 0, %s713
              %s701 = sphi %s688, %s716
              %s702 = sphi %s691, %s717
            $region54: #{minibatch_stddev.2} parent=43 // loop_header_branch
              %699 = sbr.rel (%p696) target = $region58
            $region55: #{minibatch_stddev.2} parent=43 // loop_body
              %v703 = vld [vmem:[%s701] sm:$0xff]
              %704 = vst [vmem:[%s702] sm:$0xff] %v703
              %v705 = vld [vmem:[%s701 + $0x20] sm:$0xff]
              %706 = vst [vmem:[%s702 + $0x28] sm:$0xff] %v705
              %v707 = vld [vmem:[%s701 + $0x40] sm:$0xff]
              %708 = vst [vmem:[%s702 + $0x50] sm:$0xff] %v707
              %v709 = vld [vmem:[%s701 + $0x60] sm:$0xff]
              %710 = vst [vmem:[%s702 + $0x78] sm:$0xff] %v709
              %s711 = sadd.s32 1, %s700
              %p712 = scmp.ge.s32.totalorder %s711, %s684
              %s713 = scalar_select %p712, 0, %s711
              %s714 = smul.u32 %s713, 8
              %s715 = smul.u32 %s713, 8
              %s716 = scalar_lea.vmem %s688, %s714 [#allocation3]
              %s717 = scalar_lea.vmem %s691, %s715
            $region56: #{minibatch_stddev.2} parent=43 // loop_footer
              %s697 = sadd.s32 %s695, 1
            $region57: #{minibatch_stddev.2} parent=43 // loop_footer_branch
              %694 = sbr.rel target = $region53
            $region58: #{minibatch_stddev.2} parent=43 // loop_exit
              _
          $region44: #{minibatch_stddev.2} parent=28 // pred_fallthru
            _
          %p718 = pneg %p531
          // Predicated region
          $region59: #{minibatch_stddev.2} parent=28 // pred_check
            _
          $region60: #{minibatch_stddev.2} parent=28 // pred_check_branch
            %720 = sbr.rel (%p531) target = $region62
          $region61: #{minibatch_stddev.2} parent=28 // pred_region
            %s721 = sand.u32 %s502, 7
            %s722 = ssub.s32 %s502, %s721
            %s723 = scalar_lea.vmem [#allocation3], %s722
            %s724 = ssub.s32 %s502, %s721
            %s725 = scalar_lea.vmem %s501, %s724
            %s726 = sshrl.u32 %s502, 3
            %s727 = sshrl.u32 %s726, 4
            // While loop
            $region63: #{minibatch_stddev.2} parent=61 // loop_pre_header
              _
            $region64: #{minibatch_stddev.2} parent=61 // loop_header
              %s731 = sphi 0, %s733
              %p732 = scmp.ge.s32.totalorder %s731, %s727
              %s736 = sphi 0, %s869
              %s737 = sphi [#allocation3], %s872
              %s738 = sphi %s501, %s873
            $region65: #{minibatch_stddev.2} parent=61 // loop_header_branch
              %735 = sbr.rel (%p732) target = $region69
            $region66: #{minibatch_stddev.2} parent=61 // loop_body
              %v739 = vld [vmem:[%s737] sm:$0xff]
              %740 = vst [vmem:[%s738] sm:$0xff] %v739
              %v741 = vld [vmem:[%s737 + $0x8] sm:$0xff]
              %742 = vst [vmem:[%s738 + $0x8] sm:$0xff] %v741
              %v743 = vld [vmem:[%s737 + $0x10] sm:$0xff]
              %744 = vst [vmem:[%s738 + $0x10] sm:$0xff] %v743
              %v745 = vld [vmem:[%s737 + $0x18] sm:$0xff]
              %746 = vst [vmem:[%s738 + $0x18] sm:$0xff] %v745
              %v747 = vld [vmem:[%s737 + $0x20] sm:$0xff]
              %748 = vst [vmem:[%s738 + $0x20] sm:$0xff] %v747
              %v749 = vld [vmem:[%s737 + $0x28] sm:$0xff]
              %750 = vst [vmem:[%s738 + $0x28] sm:$0xff] %v749
              %v751 = vld [vmem:[%s737 + $0x30] sm:$0xff]
              %752 = vst [vmem:[%s738 + $0x30] sm:$0xff] %v751
              %v753 = vld [vmem:[%s737 + $0x38] sm:$0xff]
              %754 = vst [vmem:[%s738 + $0x38] sm:$0xff] %v753
              %v755 = vld [vmem:[%s737 + $0x40] sm:$0xff]
              %756 = vst [vmem:[%s738 + $0x40] sm:$0xff] %v755
              %v757 = vld [vmem:[%s737 + $0x48] sm:$0xff]
              %758 = vst [vmem:[%s738 + $0x48] sm:$0xff] %v757
              %v759 = vld [vmem:[%s737 + $0x50] sm:$0xff]
              %760 = vst [vmem:[%s738 + $0x50] sm:$0xff] %v759
              %v761 = vld [vmem:[%s737 + $0x58] sm:$0xff]
              %762 = vst [vmem:[%s738 + $0x58] sm:$0xff] %v761
              %v763 = vld [vmem:[%s737 + $0x60] sm:$0xff]
              %764 = vst [vmem:[%s738 + $0x60] sm:$0xff] %v763
              %v765 = vld [vmem:[%s737 + $0x68] sm:$0xff]
              %766 = vst [vmem:[%s738 + $0x68] sm:$0xff] %v765
              %v767 = vld [vmem:[%s737 + $0x70] sm:$0xff]
              %768 = vst [vmem:[%s738 + $0x70] sm:$0xff] %v767
              %v769 = vld [vmem:[%s737 + $0x78] sm:$0xff]
              %770 = vst [vmem:[%s738 + $0x78] sm:$0xff] %v769
              %v771 = vld [vmem:[%s737 + $0x20] sm:$0xff]
              %772 = vst [vmem:[%s738 + $0x28] sm:$0xff] %v771
              %v773 = vld [vmem:[%s737 + $0x28] sm:$0xff]
              %774 = vst [vmem:[%s738 + $0x30] sm:$0xff] %v773
              %v775 = vld [vmem:[%s737 + $0x30] sm:$0xff]
              %776 = vst [vmem:[%s738 + $0x38] sm:$0xff] %v775
              %v777 = vld [vmem:[%s737 + $0x38] sm:$0xff]
              %778 = vst [vmem:[%s738 + $0x40] sm:$0xff] %v777
              %v779 = vld [vmem:[%s737 + $0x40] sm:$0xff]
              %780 = vst [vmem:[%s738 + $0x48] sm:$0xff] %v779
              %v781 = vld [vmem:[%s737 + $0x48] sm:$0xff]
              %782 = vst [vmem:[%s738 + $0x50] sm:$0xff] %v781
              %v783 = vld [vmem:[%s737 + $0x50] sm:$0xff]
              %784 = vst [vmem:[%s738 + $0x58] sm:$0xff] %v783
              %v785 = vld [vmem:[%s737 + $0x58] sm:$0xff]
              %786 = vst [vmem:[%s738 + $0x60] sm:$0xff] %v785
              %v787 = vld [vmem:[%s737 + $0x60] sm:$0xff]
              %788 = vst [vmem:[%s738 + $0x68] sm:$0xff] %v787
              %v789 = vld [vmem:[%s737 + $0x68] sm:$0xff]
              %790 = vst [vmem:[%s738 + $0x70] sm:$0xff] %v789
              %v791 = vld [vmem:[%s737 + $0x70] sm:$0xff]
              %792 = vst [vmem:[%s738 + $0x78] sm:$0xff] %v791
              %v793 = vld [vmem:[%s737 + $0x78] sm:$0xff]
              %794 = vst [vmem:[%s738 + $0x80] sm:$0xff] %v793
              %v795 = vld [vmem:[%s737 + $0x80] sm:$0xff]
              %796 = vst [vmem:[%s738 + $0x88] sm:$0xff] %v795
              %v797 = vld [vmem:[%s737 + $0x88] sm:$0xff]
              %798 = vst [vmem:[%s738 + $0x90] sm:$0xff] %v797
              %v799 = vld [vmem:[%s737 + $0x90] sm:$0xff]
              %800 = vst [vmem:[%s738 + $0x98] sm:$0xff] %v799
              %v801 = vld [vmem:[%s737 + $0x98] sm:$0xff]
              %802 = vst [vmem:[%s738 + $0xa0] sm:$0xff] %v801
              %v803 = vld [vmem:[%s737 + $0x40] sm:$0xff]
              %804 = vst [vmem:[%s738 + $0x50] sm:$0xff] %v803
              %v805 = vld [vmem:[%s737 + $0x48] sm:$0xff]
              %806 = vst [vmem:[%s738 + $0x58] sm:$0xff] %v805
              %v807 = vld [vmem:[%s737 + $0x50] sm:$0xff]
              %808 = vst [vmem:[%s738 + $0x60] sm:$0xff] %v807
              %v809 = vld [vmem:[%s737 + $0x58] sm:$0xff]
              %810 = vst [vmem:[%s738 + $0x68] sm:$0xff] %v809
              %v811 = vld [vmem:[%s737 + $0x60] sm:$0xff]
              %812 = vst [vmem:[%s738 + $0x70] sm:$0xff] %v811
              %v813 = vld [vmem:[%s737 + $0x68] sm:$0xff]
              %814 = vst [vmem:[%s738 + $0x78] sm:$0xff] %v813
              %v815 = vld [vmem:[%s737 + $0x70] sm:$0xff]
              %816 = vst [vmem:[%s738 + $0x80] sm:$0xff] %v815
              %v817 = vld [vmem:[%s737 + $0x78] sm:$0xff]
              %818 = vst [vmem:[%s738 + $0x88] sm:$0xff] %v817
              %v819 = vld [vmem:[%s737 + $0x80] sm:$0xff]
              %820 = vst [vmem:[%s738 + $0x90] sm:$0xff] %v819
              %v821 = vld [vmem:[%s737 + $0x88] sm:$0xff]
              %822 = vst [vmem:[%s738 + $0x98] sm:$0xff] %v821
              %v823 = vld [vmem:[%s737 + $0x90] sm:$0xff]
              %824 = vst [vmem:[%s738 + $0xa0] sm:$0xff] %v823
              %v825 = vld [vmem:[%s737 + $0x98] sm:$0xff]
              %826 = vst [vmem:[%s738 + $0xa8] sm:$0xff] %v825
              %v827 = vld [vmem:[%s737 + $0xa0] sm:$0xff]
              %828 = vst [vmem:[%s738 + $0xb0] sm:$0xff] %v827
              %v829 = vld [vmem:[%s737 + $0xa8] sm:$0xff]
              %830 = vst [vmem:[%s738 + $0xb8] sm:$0xff] %v829
              %v831 = vld [vmem:[%s737 + $0xb0] sm:$0xff]
              %832 = vst [vmem:[%s738 + $0xc0] sm:$0xff] %v831
              %v833 = vld [vmem:[%s737 + $0xb8] sm:$0xff]
              %834 = vst [vmem:[%s738 + $0xc8] sm:$0xff] %v833
              %v835 = vld [vmem:[%s737 + $0x60] sm:$0xff]
              %836 = vst [vmem:[%s738 + $0x78] sm:$0xff] %v835
              %v837 = vld [vmem:[%s737 + $0x68] sm:$0xff]
              %838 = vst [vmem:[%s738 + $0x80] sm:$0xff] %v837
              %v839 = vld [vmem:[%s737 + $0x70] sm:$0xff]
              %840 = vst [vmem:[%s738 + $0x88] sm:$0xff] %v839
              %v841 = vld [vmem:[%s737 + $0x78] sm:$0xff]
              %842 = vst [vmem:[%s738 + $0x90] sm:$0xff] %v841
              %v843 = vld [vmem:[%s737 + $0x80] sm:$0xff]
              %844 = vst [vmem:[%s738 + $0x98] sm:$0xff] %v843
              %v845 = vld [vmem:[%s737 + $0x88] sm:$0xff]
              %846 = vst [vmem:[%s738 + $0xa0] sm:$0xff] %v845
              %v847 = vld [vmem:[%s737 + $0x90] sm:$0xff]
              %848 = vst [vmem:[%s738 + $0xa8] sm:$0xff] %v847
              %v849 = vld [vmem:[%s737 + $0x98] sm:$0xff]
              %850 = vst [vmem:[%s738 + $0xb0] sm:$0xff] %v849
              %v851 = vld [vmem:[%s737 + $0xa0] sm:$0xff]
              %852 = vst [vmem:[%s738 + $0xb8] sm:$0xff] %v851
              %v853 = vld [vmem:[%s737 + $0xa8] sm:$0xff]
              %854 = vst [vmem:[%s738 + $0xc0] sm:$0xff] %v853
              %v855 = vld [vmem:[%s737 + $0xb0] sm:$0xff]
              %856 = vst [vmem:[%s738 + $0xc8] sm:$0xff] %v855
              %v857 = vld [vmem:[%s737 + $0xb8] sm:$0xff]
              %858 = vst [vmem:[%s738 + $0xd0] sm:$0xff] %v857
              %v859 = vld [vmem:[%s737 + $0xc0] sm:$0xff]
              %860 = vst [vmem:[%s738 + $0xd8] sm:$0xff] %v859
              %v861 = vld [vmem:[%s737 + $0xc8] sm:$0xff]
              %862 = vst [vmem:[%s738 + $0xe0] sm:$0xff] %v861
              %v863 = vld [vmem:[%s737 + $0xd0] sm:$0xff]
              %864 = vst [vmem:[%s738 + $0xe8] sm:$0xff] %v863
              %v865 = vld [vmem:[%s737 + $0xd8] sm:$0xff]
              %866 = vst [vmem:[%s738 + $0xf0] sm:$0xff] %v865
              %s867 = sadd.s32 1, %s736
              %p868 = scmp.ge.s32.totalorder %s867, %s727
              %s869 = scalar_select %p868, 0, %s867
              %s870 = smul.u32 %s869, 128
              %s871 = smul.u32 %s869, 128
              %s872 = scalar_lea.vmem [#allocation3], %s870
              %s873 = scalar_lea.vmem %s501, %s871
            $region67: #{minibatch_stddev.2} parent=61 // loop_footer
              %s733 = sadd.s32 %s731, 1
            $region68: #{minibatch_stddev.2} parent=61 // loop_footer_branch
              %730 = sbr.rel target = $region64
            $region69: #{minibatch_stddev.2} parent=61 // loop_exit
              _
            %s874 = sshrl.u32 %s726, 4
            %s875 = sand.u32 %s726, 15
            %s876 = smul.u32 %s874, 16
            %s877 = smul.u32 128, %s876
            %s878 = sshra.s32 %s877, 4
            %s879 = scalar_lea.vmem [#allocation3], %s878
            %s880 = smul.u32 128, %s876
            %s881 = sshra.s32 %s880, 4
            %s882 = scalar_lea.vmem %s501, %s881
            // While loop
            $region70: #{minibatch_stddev.2} parent=61 // loop_pre_header
              _
            $region71: #{minibatch_stddev.2} parent=61 // loop_header
              %s886 = sphi 0, %s888
              %p887 = scmp.ge.s32.totalorder %s886, %s875
              %s891 = sphi 0, %s904
              %s892 = sphi %s879, %s907
              %s893 = sphi %s882, %s908
            $region72: #{minibatch_stddev.2} parent=61 // loop_header_branch
              %890 = sbr.rel (%p887) target = $region76
            $region73: #{minibatch_stddev.2} parent=61 // loop_body
              %v894 = vld [vmem:[%s892] sm:$0xff]
              %895 = vst [vmem:[%s893] sm:$0xff] %v894
              %v896 = vld [vmem:[%s892 + $0x20] sm:$0xff]
              %897 = vst [vmem:[%s893 + $0x28] sm:$0xff] %v896
              %v898 = vld [vmem:[%s892 + $0x40] sm:$0xff]
              %899 = vst [vmem:[%s893 + $0x50] sm:$0xff] %v898
              %v900 = vld [vmem:[%s892 + $0x60] sm:$0xff]
              %901 = vst [vmem:[%s893 + $0x78] sm:$0xff] %v900
              %s902 = sadd.s32 1, %s891
              %p903 = scmp.ge.s32.totalorder %s902, %s875
              %s904 = scalar_select %p903, 0, %s902
              %s905 = smul.u32 %s904, 8
              %s906 = smul.u32 %s904, 8
              %s907 = scalar_lea.vmem %s879, %s905 [#allocation3]
              %s908 = scalar_lea.vmem %s882, %s906
            $region74: #{minibatch_stddev.2} parent=61 // loop_footer
              %s888 = sadd.s32 %s886, 1
            $region75: #{minibatch_stddev.2} parent=61 // loop_footer_branch
              %885 = sbr.rel target = $region71
            $region76: #{minibatch_stddev.2} parent=61 // loop_exit
              _
            %s909 = sshllo.u32 0, %s721
            loop: start=0, step=1, limit=1
            $region77: #{minibatch_stddev.2} parent=61 // loop_pre_header
              _
            $region78: #{minibatch_stddev.2} parent=61 // loop_header
              %s911 = sphi 0, %s915
              %p912 = scmp.ge.s32.totalorder %s911, 1
              %s916 = sphi %s723, %s723
              %s917 = sphi %s725, %s725
            $region79: #{minibatch_stddev.2} parent=61 // loop_header_branch
              %914 = sbr.rel (%p912) target = $region83
            $region80: #{minibatch_stddev.2} parent=61 // loop_body
              %v918 = vld [vmem:[%s916] sm:%s909]
              %919 = vst [vmem:[%s917] sm:%s909] %v918
              %v920 = vld [vmem:[%s916 + $0x20] sm:%s909]
              %921 = vst [vmem:[%s917 + $0x28] sm:%s909] %v920
              %v922 = vld [vmem:[%s916 + $0x40] sm:%s909]
              %923 = vst [vmem:[%s917 + $0x50] sm:%s909] %v922
              %v924 = vld [vmem:[%s916 + $0x60] sm:%s909]
              %925 = vst [vmem:[%s917 + $0x78] sm:%s909] %v924
            $region81: #{minibatch_stddev.2} parent=61 // loop_footer
              %s915 = sadd.s32 1, %s911
            $region82: #{minibatch_stddev.2} parent=61 // loop_footer_branch
              %910 = sbr.rel target = $region78
            $region83: #{minibatch_stddev.2} parent=61 // loop_exit
              _
          $region62: #{minibatch_stddev.2} parent=28 // pred_fallthru
            _
        $region29: #{minibatch_stddev.2} parent=24 // pred_fallthru
          _
        // Predicated region
        $region30: #{minibatch_stddev.2} parent=24 // pred_check
          %p510 = pneg %p506
        $region31: #{minibatch_stddev.2} parent=24 // pred_check_branch
          %512 = sbr.rel (%p510) target = $region33
        $region32: #{minibatch_stddev.2} parent=24 // pred_region
          %s513 = sshllo.u32 0, %s502
          loop: start=0, step=1, limit=1
          $region34: #{minibatch_stddev.2} parent=32 // loop_pre_header
            _
          $region35: #{minibatch_stddev.2} parent=32 // loop_header
            %s515 = sphi 0, %s519
            %p516 = scmp.ge.s32.totalorder %s515, 1
            %s520 = sphi [#allocation3], [#allocation3]
            %s521 = sphi %s501, %s501
          $region36: #{minibatch_stddev.2} parent=32 // loop_header_branch
            %518 = sbr.rel (%p516) target = $region40
          $region37: #{minibatch_stddev.2} parent=32 // loop_body
            %v522 = vld [vmem:[%s520] sm:%s513]
            %523 = vst [vmem:[%s521] sm:%s513] %v522
            %v524 = vld [vmem:[%s520 + $0x20] sm:%s513]
            %525 = vst [vmem:[%s521 + $0x28] sm:%s513] %v524
            %v526 = vld [vmem:[%s520 + $0x40] sm:%s513]
            %527 = vst [vmem:[%s521 + $0x50] sm:%s513] %v526
            %v528 = vld [vmem:[%s520 + $0x60] sm:%s513]
            %529 = vst [vmem:[%s521 + $0x78] sm:%s513] %v528
          $region38: #{minibatch_stddev.2} parent=32 // loop_footer
            %s519 = sadd.s32 1, %s515
          $region39: #{minibatch_stddev.2} parent=32 // loop_footer_branch
            %514 = sbr.rel target = $region35
          $region40: #{minibatch_stddev.2} parent=32 // loop_exit
            _
        $region33: #{minibatch_stddev.2} parent=24 // pred_fallthru
          _
      $region25: #{minibatch_stddev.2} parent=20 // pred_fallthru
        _
      %926 = vnop
    $region21: #{minibatch_stddev.2} parent=1 // pred_fallthru
      _
    // Predicated region
    $region84: #{minibatch_stddev.2} parent=1 // pred_check
      _
    $region85: #{minibatch_stddev.2} parent=1 // pred_check_branch
      %928 = sbr.rel (0) target = $region87
    $region86: #{minibatch_stddev.2} parent=1 // pred_region
      _
    $region87: #{minibatch_stddev.2} parent=1 // pred_fallthru
      _
    // Predicated region
    $region88: #{minibatch_stddev.2} parent=1 // pred_check
      _
    $region89: #{minibatch_stddev.2} parent=1 // pred_check_branch
      %930 = sbr.rel (0) target = $region91
    $region90: #{minibatch_stddev.2} parent=1 // pred_region
      _
    $region91: #{minibatch_stddev.2} parent=1 // pred_fallthru
      _

</llo_original>
